<compile_context>
chip_gen: v5e
topology: v5e:2x2
jax: 0.10.0
libtpu: 0.0.40
codegen_flags: <defaults>
</compile_context>

<pallas_src>
import jax
import jax.numpy as jnp
from jax.experimental import pallas as pl
from jax.experimental.pallas import tpu as pltpu

OUT_PAD = 128  # lane-dense output width (multiple of the 128-lane vreg width)


def _small_matmul(x, w):
    """x:(T,K) @ w:(K,M) with tiny K, as an unrolled broadcast-FMA on the VPU."""
    acc = x[:, 0:1] * w[0:1, :]
    for j in range(1, x.shape[1]):
        acc = acc + x[:, j:j + 1] * w[j:j + 1, :]
    return acc


def hybrid_fwd_kernel(ids_ref,        # scalar prefetch: (n_pad,) int32 in SMEM
                      dense_ref,      # (TN, D_DENSE)              f32
                      em_w_ref,       # (V, D_SPARSE)              f32 (VMEM-resident table)
                      fc1_wt_ref,     # (D_DENSE, D_DENSE)         f32 (pre-transposed)
                      fc1_b_ref,      # (1, D_DENSE)               f32
                      net_wt_ref,     # (D_DENSE+D_SPARSE, D_HID)  f32 (pre-transposed)
                      net_b_ref,      # (1, D_HID)                 f32
                      fc2_wt_ref,     # (D_HID, OUT_PAD)           f32 (zero-padded)
                      fc2_b_ref,      # (1, OUT_PAD)               f32 (zero-padded)
                      out_ref,        # (TN, OUT_PAD)              f32
                      em_scratch):    # VMEM (TN, D_SPARSE)        f32
    tn, d_dense = dense_ref.shape
    base = pl.program_id(0) * tn

    # ---- RemoteEM: EmbeddingBag with offsets=arange(N) => per-row gather. ----
    # Indices live in SMEM (scalar prefetch); one dynamic-row VMEM load per bag.
    # For large vocabularies the table would stay in HBM (memory_space=pl.ANY)
    # with per-row DMA; this table is tiny so it stays resident in VMEM.
    @pl.loop(0, tn)
    def _(r):
        idx = ids_ref[base + r]
        em_scratch[pl.ds(r, 1), :] = em_w_ref[pl.ds(idx, 1), :]

    em = em_scratch[...]        # (TN, D_SPARSE)
    dense = dense_ref[...]      # (TN, D_DENSE)

    # ---- fc1 (local Linear) ----
    h1 = _small_matmul(dense, fc1_wt_ref[...]) + fc1_b_ref[...]

    # ---- torch.cat((h1, em), dim=1) followed by RemoteNet Linear+ReLU.
    # cat + matmul is expressed as a split matmul (identical math, no concat).
    net_wt = net_wt_ref[...]
    z = (_small_matmul(h1, net_wt[:d_dense, :])
         + _small_matmul(em, net_wt[d_dense:, :])
         + net_b_ref[...])
    h2 = jnp.maximum(z, 0.0)

    # ---- fc2 (local Linear), lane-dense (padded to OUT_PAD columns) ----
    out_ref[...] = _small_matmul(h2, fc2_wt_ref[...]) + fc2_b_ref[...]


def hybrid_model_forward(dense, sparse_ids, em_w,
                         fc1_w, fc1_b, net_w, net_b, fc2_w, fc2_b,
                         *, tn=128):
    """Pallas implementation of HybridModel.forward (single fused kernel)."""
    dense = dense.astype(jnp.float32)
    em_w = em_w.astype(jnp.float32)
    n, d_dense = dense.shape
    num_rows, d_sparse = em_w.shape
    d_hid = net_w.shape[0]
    d_out = fc2_w.shape[0]
    assert net_w.shape[1] == d_dense + d_sparse

    # Pad the batch to a multiple of the row tile (ragged N supported).
    n_pad = ((n + tn - 1) // tn) * tn
    ids = jnp.clip(sparse_ids.astype(jnp.int32), 0, num_rows - 1)
    # TODO(synk): nn.EmbeddingBag raises on out-of-range indices; we clamp instead.
    if n_pad != n:
        dense = jnp.pad(dense, ((0, n_pad - n), (0, 0)))
        ids = jnp.pad(ids, (0, n_pad - n))

    # Wrapper-side layout plumbing: transpose Linear weights to (in, out), make
    # biases 2-D, and zero-pad fc2 so the kernel output is 128 lanes wide.
    fc1_wt = fc1_w.T.astype(jnp.float32)
    fc1_b2 = fc1_b.reshape(1, d_dense).astype(jnp.float32)
    net_wt = net_w.T.astype(jnp.float32)
    net_b2 = net_b.reshape(1, d_hid).astype(jnp.float32)
    fc2_wt = jnp.zeros((d_hid, OUT_PAD), jnp.float32).at[:, :d_out].set(
        fc2_w.T.astype(jnp.float32))
    fc2_b2 = jnp.zeros((1, OUT_PAD), jnp.float32).at[:, :d_out].set(
        fc2_b.astype(jnp.float32))

    grid = (n_pad // tn,)
    flops = 2 * n_pad * (d_dense * d_dense
                         + (d_dense + d_sparse) * d_hid
                         + d_hid * OUT_PAD)
    bytes_accessed = 4 * (n_pad * d_dense          # dense activations
                          + n_pad                  # int32 indices
                          + n_pad * d_sparse       # gathered embedding rows
                          + n_pad * OUT_PAD        # output
                          + num_rows * d_sparse    # embedding table
                          + fc1_wt.size + fc1_b2.size + net_wt.size
                          + net_b2.size + fc2_wt.size + fc2_b2.size)

    out_padded = pl.pallas_call(
        hybrid_fwd_kernel,
        out_shape=jax.ShapeDtypeStruct((n_pad, OUT_PAD), jnp.float32),
        grid_spec=pltpu.PrefetchScalarGridSpec(
            num_scalar_prefetch=1,
            grid=grid,
            in_specs=[
                pl.BlockSpec((tn, d_dense), lambda i, _ids: (i, 0)),
                pl.BlockSpec((num_rows, d_sparse), lambda i, _ids: (0, 0)),
                pl.BlockSpec((d_dense, d_dense), lambda i, _ids: (0, 0)),
                pl.BlockSpec((1, d_dense), lambda i, _ids: (0, 0)),
                pl.BlockSpec((d_dense + d_sparse, d_hid), lambda i, _ids: (0, 0)),
                pl.BlockSpec((1, d_hid), lambda i, _ids: (0, 0)),
                pl.BlockSpec((d_hid, OUT_PAD), lambda i, _ids: (0, 0)),
                pl.BlockSpec((1, OUT_PAD), lambda i, _ids: (0, 0)),
            ],
            out_specs=pl.BlockSpec((tn, OUT_PAD), lambda i, _ids: (i, 0)),
            scratch_shapes=[pltpu.VMEM((tn, d_sparse), jnp.float32)],
        ),
        compiler_params=pltpu.CompilerParams(
            dimension_semantics=("parallel",),
            vmem_limit_bytes=32 * 1024 * 1024,
        ),
        cost_estimate=pl.CostEstimate(
            flops=flops, transcendentals=0, bytes_accessed=bytes_accessed),
    )(ids, dense, em_w, fc1_wt, fc1_b2, net_wt, net_b2, fc2_wt, fc2_b2)

    return out_padded[:n, :d_out]


if __name__ == "__main__":
    # Module constants: D_DENSE = 2, D_HID = 3, D_OUT = 2; the embedding side
    # uses a small table (NUM_EM_ROW rows of width D_SPARSE).
    D_DENSE, D_HID, D_OUT = 2, 3, 2
    NUM_EM_ROW, D_SPARSE = 16, 3
    batch = 200  # not a multiple of the 128-row tile: exercises the padded tail

    key = jax.random.PRNGKey(0)
    k_ids, k_dense, k1, k2, k3, k4, k5, k6, k_em = jax.random.split(key, 9)

    sparse = jax.random.randint(k_ids, (batch,), 0, NUM_EM_ROW, dtype=jnp.int32)
    dense = jax.random.normal(k_dense, (batch, D_DENSE), dtype=jnp.float32)

    # RemoteEM init: _weight = torch.ones(num_embeddings, embedding_dim)
    em_w_ones = jnp.ones((NUM_EM_ROW, D_SPARSE), jnp.float32)
    # Linear layers (PyTorch weight convention: (out_features, in_features)).
    fc1_w = 0.1 * jax.random.normal(k1, (D_DENSE, D_DENSE), jnp.float32)
    fc1_b = 0.1 * jax.random.normal(k2, (D_DENSE,), jnp.float32)
    net_w = 0.1 * jax.random.normal(k3, (D_HID, D_DENSE + D_SPARSE), jnp.float32)
    net_b = 0.1 * jax.random.normal(k4, (D_HID,), jnp.float32)
    fc2_w = 0.1 * jax.random.normal(k5, (D_OUT, D_HID), jnp.float32)
    fc2_b = 0.1 * jax.random.normal(k6, (D_OUT,), jnp.float32)

    def reference(dense_x, sparse_x, em_w):
        em = em_w[sparse_x]                      # EmbeddingBag, bag size 1
        h1 = dense_x @ fc1_w.T + fc1_b           # fc1
        x = jnp.concatenate([h1, em], axis=1)    # torch.cat(..., 1)
        h2 = jnp.maximum(x @ net_w.T + net_b, 0.0)   # RemoteNet
        return h2 @ fc2_w.T + fc2_b              # fc2

    out = hybrid_model_forward(dense, sparse, em_w_ones,
                               fc1_w, fc1_b, net_w, net_b, fc2_w, fc2_b)
    out = jax.block_until_ready(out)
    assert out.shape == (batch, D_OUT)
    assert jnp.allclose(out, reference(dense, sparse, em_w_ones),
                        atol=1e-5, rtol=1e-5), "mismatch vs reference (ones table)"

    # Extra check with a non-trivial table so the in-kernel gather is actually
    # exercised (the module's ones-init makes every gathered row identical).
    em_w_rand = jax.random.normal(k_em, (NUM_EM_ROW, D_SPARSE), dtype=jnp.float32)
    out2 = jax.block_until_ready(
        hybrid_model_forward(dense, sparse, em_w_rand,
                             fc1_w, fc1_b, net_w, net_b, fc2_w, fc2_b))
    assert jnp.allclose(out2, reference(dense, sparse, em_w_rand),
                        atol=1e-5, rtol=1e-5), "mismatch vs reference (random table)"

    print("KERNEL_OK")
</pallas_src>

<mosaic_0001>
module attributes {stable_mosaic.version = 11 : i64} {
  func.func @hybrid_fwd_kernel(%arg0: i32, %arg1: memref<256xi32, #tpu.memory_space<smem>>, %arg2: memref<128x2xf32, #tpu.memory_space<vmem>>, %arg3: memref<16x3xf32, #tpu.memory_space<vmem>>, %arg4: memref<2x2xf32, #tpu.memory_space<vmem>>, %arg5: memref<1x2xf32, #tpu.memory_space<vmem>>, %arg6: memref<5x3xf32, #tpu.memory_space<vmem>>, %arg7: memref<1x3xf32, #tpu.memory_space<vmem>>, %arg8: memref<3x128xf32, #tpu.memory_space<vmem>>, %arg9: memref<1x128xf32, #tpu.memory_space<vmem>>, %arg10: memref<128x128xf32, #tpu.memory_space<vmem>>, %arg11: memref<128x3xf32, #tpu.memory_space<vmem>>) attributes {dimension_semantics = [#tpu.dimension_semantics<parallel>], iteration_bounds = array<i64: 2>, scalar_prefetch = 1 : i64, scratch_operands = 1 : i64, tpu.core_type = #tpu.core_type<tc>, window_params = [{transform_indices = @transform_0, window_bounds = array<i64: 128, 2>}, {pipeline_mode = #tpu.pipeline_mode<synchronous>, transform_indices = @transform_1, window_bounds = array<i64: 16, 3>}, {pipeline_mode = #tpu.pipeline_mode<synchronous>, transform_indices = @transform_2, window_bounds = array<i64: 2, 2>}, {pipeline_mode = #tpu.pipeline_mode<synchronous>, transform_indices = @transform_3, window_bounds = array<i64: 1, 2>}, {pipeline_mode = #tpu.pipeline_mode<synchronous>, transform_indices = @transform_4, window_bounds = array<i64: 5, 3>}, {pipeline_mode = #tpu.pipeline_mode<synchronous>, transform_indices = @transform_5, window_bounds = array<i64: 1, 3>}, {pipeline_mode = #tpu.pipeline_mode<synchronous>, transform_indices = @transform_6, window_bounds = array<i64: 3, 128>}, {pipeline_mode = #tpu.pipeline_mode<synchronous>, transform_indices = @transform_7, window_bounds = array<i64: 1, 128>}, {transform_indices = @transform_8, window_bounds = array<i64: 128, 128>}]} {
    %c128_i32 = arith.constant 128 : i32
    %0 = arith.muli %arg0, %c128_i32 : i32
    %c0_i32 = arith.constant 0 : i32
    %c128_i32_0 = arith.constant 128 : i32
    %1 = arith.addi %c0_i32, %c128_i32_0 : i32
    %c1_i32 = arith.constant 1 : i32
    scf.for %arg12 = %c0_i32 to %1 step %c1_i32  : i32 {
      %c1_i32_19 = arith.constant 1 : i32
      %78 = arith.muli %arg12, %c1_i32_19 : i32
      %c0_i32_20 = arith.constant 0 : i32
      %79 = arith.addi %c0_i32_20, %78 : i32
      %80 = arith.addi %0, %79 : i32
      %81 = arith.index_cast %80 : i32 to index
      %82 = memref.load %arg1[%81] : memref<256xi32, #tpu.memory_space<smem>>
      %83 = arith.index_cast %82 : i32 to index
      %c0_21 = arith.constant 0 : index
      %84 = vector.load %arg3[%83, %c0_21] : memref<16x3xf32, #tpu.memory_space<vmem>>, vector<1x3xf32>
      %85 = arith.index_cast %79 : i32 to index
      %c0_22 = arith.constant 0 : index
      %86 = vector.load %arg11[%85, %c0_22] : memref<128x3xf32, #tpu.memory_space<vmem>>, vector<1x3xf32>
      tpu.vector_store %arg11[%85, %c0_22], %84 {strides = array<i32>} : memref<128x3xf32, #tpu.memory_space<vmem>>, vector<1x3xf32>,
    }
    %c128_i32_1 = arith.constant 128 : i32
    %c0 = arith.constant 0 : index
    %c0_2 = arith.constant 0 : index
    %2 = vector.load %arg11[%c0, %c0_2] : memref<128x3xf32, #tpu.memory_space<vmem>>, vector<128x3xf32>
    %c0_3 = arith.constant 0 : index
    %c0_4 = arith.constant 0 : index
    %3 = vector.load %arg2[%c0_3, %c0_4] : memref<128x2xf32, #tpu.memory_space<vmem>>, vector<128x2xf32>
    %c0_5 = arith.constant 0 : index
    %c0_6 = arith.constant 0 : index
    %4 = vector.load %arg4[%c0_5, %c0_6] : memref<2x2xf32, #tpu.memory_space<vmem>>, vector<2x2xf32>
    %5 = vector.extract_strided_slice %3 {offsets = [0, 0], sizes = [128, 1], strides = [1, 1]} : vector<128x2xf32> to vector<128x1xf32>
    %6 = vector.extract_strided_slice %4 {offsets = [0, 0], sizes = [1, 2], strides = [1, 1]} : vector<2x2xf32> to vector<1x2xf32>
    %7 = vector.broadcast %5 : vector<128x1xf32> to vector<128x2xf32>
    %8 = vector.broadcast %6 : vector<1x2xf32> to vector<128x2xf32>
    %9 = arith.mulf %7, %8 : vector<128x2xf32>
    %10 = vector.extract_strided_slice %3 {offsets = [0, 1], sizes = [128, 1], strides = [1, 1]} : vector<128x2xf32> to vector<128x1xf32>
    %11 = vector.extract_strided_slice %4 {offsets = [1, 0], sizes = [1, 2], strides = [1, 1]} : vector<2x2xf32> to vector<1x2xf32>
    %12 = vector.broadcast %10 : vector<128x1xf32> to vector<128x2xf32>
    %13 = vector.broadcast %11 : vector<1x2xf32> to vector<128x2xf32>
    %14 = arith.mulf %12, %13 : vector<128x2xf32>
    %15 = arith.addf %9, %14 : vector<128x2xf32>
    %c0_7 = arith.constant 0 : index
    %c0_8 = arith.constant 0 : index
    %16 = vector.load %arg5[%c0_7, %c0_8] : memref<1x2xf32, #tpu.memory_space<vmem>>, vector<1x2xf32>
    %17 = vector.broadcast %16 : vector<1x2xf32> to vector<128x2xf32>
    %18 = arith.addf %15, %17 : vector<128x2xf32>
    %c0_9 = arith.constant 0 : index
    %c0_10 = arith.constant 0 : index
    %19 = vector.load %arg6[%c0_9, %c0_10] : memref<5x3xf32, #tpu.memory_space<vmem>>, vector<5x3xf32>
    %20 = vector.extract_strided_slice %19 {offsets = [0, 0], sizes = [2, 3], strides = [1, 1]} : vector<5x3xf32> to vector<2x3xf32>
    %21 = vector.extract_strided_slice %18 {offsets = [0, 0], sizes = [128, 1], strides = [1, 1]} : vector<128x2xf32> to vector<128x1xf32>
    %22 = vector.extract_strided_slice %20 {offsets = [0, 0], sizes = [1, 3], strides = [1, 1]} : vector<2x3xf32> to vector<1x3xf32>
    %23 = vector.broadcast %21 : vector<128x1xf32> to vector<128x3xf32>
    %24 = vector.broadcast %22 : vector<1x3xf32> to vector<128x3xf32>
    %25 = arith.mulf %23, %24 : vector<128x3xf32>
    %26 = vector.extract_strided_slice %18 {offsets = [0, 1], sizes = [128, 1], strides = [1, 1]} : vector<128x2xf32> to vector<128x1xf32>
    %27 = vector.extract_strided_slice %20 {offsets = [1, 0], sizes = [1, 3], strides = [1, 1]} : vector<2x3xf32> to vector<1x3xf32>
    %28 = vector.broadcast %26 : vector<128x1xf32> to vector<128x3xf32>
    %29 = vector.broadcast %27 : vector<1x3xf32> to vector<128x3xf32>
    %30 = arith.mulf %28, %29 : vector<128x3xf32>
    %31 = arith.addf %25, %30 : vector<128x3xf32>
    %32 = vector.extract_strided_slice %19 {offsets = [2, 0], sizes = [3, 3], strides = [1, 1]} : vector<5x3xf32> to vector<3x3xf32>
    %33 = vector.extract_strided_slice %2 {offsets = [0, 0], sizes = [128, 1], strides = [1, 1]} : vector<128x3xf32> to vector<128x1xf32>
    %34 = vector.extract_strided_slice %32 {offsets = [0, 0], sizes = [1, 3], strides = [1, 1]} : vector<3x3xf32> to vector<1x3xf32>
    %35 = vector.broadcast %33 : vector<128x1xf32> to vector<128x3xf32>
    %36 = vector.broadcast %34 : vector<1x3xf32> to vector<128x3xf32>
    %37 = arith.mulf %35, %36 : vector<128x3xf32>
    %38 = vector.extract_strided_slice %2 {offsets = [0, 1], sizes = [128, 1], strides = [1, 1]} : vector<128x3xf32> to vector<128x1xf32>
    %39 = vector.extract_strided_slice %32 {offsets = [1, 0], sizes = [1, 3], strides = [1, 1]} : vector<3x3xf32> to vector<1x3xf32>
    %40 = vector.broadcast %38 : vector<128x1xf32> to vector<128x3xf32>
    %41 = vector.broadcast %39 : vector<1x3xf32> to vector<128x3xf32>
    %42 = arith.mulf %40, %41 : vector<128x3xf32>
    %43 = arith.addf %37, %42 : vector<128x3xf32>
    %44 = vector.extract_strided_slice %2 {offsets = [0, 2], sizes = [128, 1], strides = [1, 1]} : vector<128x3xf32> to vector<128x1xf32>
    %45 = vector.extract_strided_slice %32 {offsets = [2, 0], sizes = [1, 3], strides = [1, 1]} : vector<3x3xf32> to vector<1x3xf32>
    %46 = vector.broadcast %44 : vector<128x1xf32> to vector<128x3xf32>
    %47 = vector.broadcast %45 : vector<1x3xf32> to vector<128x3xf32>
    %48 = arith.mulf %46, %47 : vector<128x3xf32>
    %49 = arith.addf %43, %48 : vector<128x3xf32>
    %50 = arith.addf %31, %49 : vector<128x3xf32>
    %c0_11 = arith.constant 0 : index
    %c0_12 = arith.constant 0 : index
    %51 = vector.load %arg7[%c0_11, %c0_12] : memref<1x3xf32, #tpu.memory_space<vmem>>, vector<1x3xf32>
    %52 = vector.broadcast %51 : vector<1x3xf32> to vector<128x3xf32>
    %53 = arith.addf %50, %52 : vector<128x3xf32>
    %cst = arith.constant 0.000000e+00 : f32
    %54 = vector.broadcast %cst : f32 to vector<128x3xf32>
    %55 = arith.maximumf %53, %54 : vector<128x3xf32>
    %c0_13 = arith.constant 0 : index
    %c0_14 = arith.constant 0 : index
    %56 = vector.load %arg8[%c0_13, %c0_14] : memref<3x128xf32, #tpu.memory_space<vmem>>, vector<3x128xf32>
    %57 = vector.extract_strided_slice %55 {offsets = [0, 0], sizes = [128, 1], strides = [1, 1]} : vector<128x3xf32> to vector<128x1xf32>
    %58 = vector.extract_strided_slice %56 {offsets = [0, 0], sizes = [1, 128], strides = [1, 1]} : vector<3x128xf32> to vector<1x128xf32>
    %59 = vector.broadcast %57 : vector<128x1xf32> to vector<128x128xf32>
    %60 = vector.broadcast %58 : vector<1x128xf32> to vector<128x128xf32>
    %61 = arith.mulf %59, %60 : vector<128x128xf32>
    %62 = vector.extract_strided_slice %55 {offsets = [0, 1], sizes = [128, 1], strides = [1, 1]} : vector<128x3xf32> to vector<128x1xf32>
    %63 = vector.extract_strided_slice %56 {offsets = [1, 0], sizes = [1, 128], strides = [1, 1]} : vector<3x128xf32> to vector<1x128xf32>
    %64 = vector.broadcast %62 : vector<128x1xf32> to vector<128x128xf32>
    %65 = vector.broadcast %63 : vector<1x128xf32> to vector<128x128xf32>
    %66 = arith.mulf %64, %65 : vector<128x128xf32>
    %67 = arith.addf %61, %66 : vector<128x128xf32>
    %68 = vector.extract_strided_slice %55 {offsets = [0, 2], sizes = [128, 1], strides = [1, 1]} : vector<128x3xf32> to vector<128x1xf32>
    %69 = vector.extract_strided_slice %56 {offsets = [2, 0], sizes = [1, 128], strides = [1, 1]} : vector<3x128xf32> to vector<1x128xf32>
    %70 = vector.broadcast %68 : vector<128x1xf32> to vector<128x128xf32>
    %71 = vector.broadcast %69 : vector<1x128xf32> to vector<128x128xf32>
    %72 = arith.mulf %70, %71 : vector<128x128xf32>
    %73 = arith.addf %67, %72 : vector<128x128xf32>
    %c0_15 = arith.constant 0 : index
    %c0_16 = arith.constant 0 : index
    %74 = vector.load %arg9[%c0_15, %c0_16] : memref<1x128xf32, #tpu.memory_space<vmem>>, vector<1x128xf32>
    %75 = vector.broadcast %74 : vector<1x128xf32> to vector<128x128xf32>
    %76 = arith.addf %73, %75 : vector<128x128xf32>
    %c0_17 = arith.constant 0 : index
    %c0_18 = arith.constant 0 : index
    %77 = vector.load %arg10[%c0_17, %c0_18] : memref<128x128xf32, #tpu.memory_space<vmem>>, vector<128x128xf32>
    tpu.vector_store %arg10[%c0_17, %c0_18], %76 {strides = array<i32>} : memref<128x128xf32, #tpu.memory_space<vmem>>, vector<128x128xf32>,
    return
  }
  func.func @transform_0(%arg0: i32, %arg1: memref<256xi32, #tpu.memory_space<smem>>) -> (i32, i32) {
    %c0_i32 = arith.constant 0 : i32
    %c0_i32_0 = arith.constant 0 : i32
    return %arg0, %c0_i32 : i32, i32
  }
  func.func @transform_1(%arg0: i32, %arg1: memref<256xi32, #tpu.memory_space<smem>>) -> (i32, i32) {
    %c0_i32 = arith.constant 0 : i32
    %c0_i32_0 = arith.constant 0 : i32
    %c0_i32_1 = arith.constant 0 : i32
    return %c0_i32, %c0_i32_0 : i32, i32
  }
  func.func @transform_2(%arg0: i32, %arg1: memref<256xi32, #tpu.memory_space<smem>>) -> (i32, i32) {
    %c0_i32 = arith.constant 0 : i32
    %c0_i32_0 = arith.constant 0 : i32
    %c0_i32_1 = arith.constant 0 : i32
    return %c0_i32, %c0_i32_0 : i32, i32
  }
  func.func @transform_3(%arg0: i32, %arg1: memref<256xi32, #tpu.memory_space<smem>>) -> (i32, i32) {
    %c0_i32 = arith.constant 0 : i32
    %c0_i32_0 = arith.constant 0 : i32
    %c0_i32_1 = arith.constant 0 : i32
    return %c0_i32, %c0_i32_0 : i32, i32
  }
  func.func @transform_4(%arg0: i32, %arg1: memref<256xi32, #tpu.memory_space<smem>>) -> (i32, i32) {
    %c0_i32 = arith.constant 0 : i32
    %c0_i32_0 = arith.constant 0 : i32
    %c0_i32_1 = arith.constant 0 : i32
    return %c0_i32, %c0_i32_0 : i32, i32
  }
  func.func @transform_5(%arg0: i32, %arg1: memref<256xi32, #tpu.memory_space<smem>>) -> (i32, i32) {
    %c0_i32 = arith.constant 0 : i32
    %c0_i32_0 = arith.constant 0 : i32
    %c0_i32_1 = arith.constant 0 : i32
    return %c0_i32, %c0_i32_0 : i32, i32
  }
  func.func @transform_6(%arg0: i32, %arg1: memref<256xi32, #tpu.memory_space<smem>>) -> (i32, i32) {
    %c0_i32 = arith.constant 0 : i32
    %c0_i32_0 = arith.constant 0 : i32
    %c0_i32_1 = arith.constant 0 : i32
    return %c0_i32, %c0_i32_0 : i32, i32
  }
  func.func @transform_7(%arg0: i32, %arg1: memref<256xi32, #tpu.memory_space<smem>>) -> (i32, i32) {
    %c0_i32 = arith.constant 0 : i32
    %c0_i32_0 = arith.constant 0 : i32
    %c0_i32_1 = arith.constant 0 : i32
    return %c0_i32, %c0_i32_0 : i32, i32
  }
  func.func @transform_8(%arg0: i32, %arg1: memref<256xi32, #tpu.memory_space<smem>>) -> (i32, i32) {
    %c0_i32 = arith.constant 0 : i32
    %c0_i32_0 = arith.constant 0 : i32
    return %arg0, %c0_i32 : i32, i32
  }
}

</mosaic_0001>

<llo_original>
// kernel: tpu_custom_call.1
$region0: #{tpu_custom_call.1}
  #allocation0 [shape = 'u32[]', space=smem, size = 0x4, offset = 0x4, fixed_abs, tag = 'smem constant byte address 0x4 - core index']
  #allocation1 [shape = 'u32[72,128]{1,0:T(1,128)}', space=vmem, size = 0x9000, scoped, tag = 'internal scratch']
  #allocation2 [shape = 'f32[128,3]{1,0:T(8,128)}', space=vmem, size = 0x10000, scoped, tag = 'scratch operand']
  #allocation3 [shape = 's32[1]{0}', space=sflag, size = 0x4, scoped, tag = 'scoped memory for tpu_custom_call.1']
  #allocation4 [shape = 'u8[1024]{0}', space=smem, size = 0x400, scoped, tag = 'prefetched SMEM operand 0']
  %s0 = inlined_call_operand.vmem [shape: s32[256], index: 0, kind: input, shape index: {}]
  %s1 = inlined_call_operand.vmem [shape: f32[256,2], index: 1, kind: input, shape index: {}]
  %s2 = inlined_call_operand.vmem [shape: f32[16,3], index: 2, kind: input, shape index: {}]
  %s3 = inlined_call_operand.vmem [shape: f32[2,2], index: 3, kind: input, shape index: {}]
  %s4 = inlined_call_operand.vmem [shape: f32[1,2], index: 4, kind: input, shape index: {}]
  %s5 = inlined_call_operand.vmem [shape: f32[5,3], index: 5, kind: input, shape index: {}]
  %s6 = inlined_call_operand.vmem [shape: f32[1,3], index: 6, kind: input, shape index: {}]
  %s7 = inlined_call_operand.vmem [shape: f32[3,128], index: 7, kind: input, shape index: {}]
  %s8 = inlined_call_operand.vmem [shape: f32[1,128], index: 8, kind: input, shape index: {}]
  %s9 = inlined_call_operand.hbm [shape: f32[256,128], index: 9, kind: output, shape index: {}]
  %s10 = sld [smem:[#allocation0]]
  $region72: #{tpu_custom_call.1} parent=0
    _
  %s12 = ssub.s32 1, %s10
  %s13 = scalar_select 0, %s12, %s10
  %s15 = sshll.u32 %s0, 4
  %s16 = int_to_ptr.vmem [resolvable:$true] %s15
  %18 = dma.vmem_to_smem %s16, 32, [#allocation4], [#allocation3]
  %20 = dma.done [#allocation3], 32
  %21 = sfence
  $region1: #{tpu_custom_call.1} parent=0
    #allocation5 [shape = 'u8[131072]{0}', space=vmem, size = 0x20000, scoped, tag = 'output window, operand 0']
    #allocation6 [shape = 's32[2]{0}', space=sflag, size = 0x8, scoped, tag = 'scoped memory for tpu_custom_call.1']
    %22 = vsyncpa [#allocation6], 0
    %s23 = scalar_lea.sflag [#allocation6], 1
    %24 = vsyncpa %s23, 0
    loop: start=0, step=1, limit=4
    $region2: #{tpu_custom_call.1} parent=1 // loop_pre_header
      _
    $region3: #{tpu_custom_call.1} parent=1 // loop_header
      %s26 = sphi 0, %s30
      %p27 = scmp.ge.s32.totalorder %s26, 4
      %s36 = sphi 0, %s38
      %s39 = sphi 0, %s36
      %s40 = sphi 0, %s39
      %s56 = sphi 0, %s40
      %s60 = sphi 0, %s60
      %s62 = sphi 0, %s60
      %s63 = sphi 0, %s62
      %s77 = sphi 0, %s63
      %s81 = sphi 0, %s81
      %s83 = sphi 0, %s81
      %s84 = sphi 0, %s83
      %s98 = sphi 0, %s84
      %s102 = sphi 0, %s102
      %s104 = sphi 0, %s102
      %s105 = sphi 0, %s104
      %s119 = sphi 0, %s105
      %s123 = sphi 0, %s123
      %s125 = sphi 0, %s123
      %s126 = sphi 0, %s125
      %s140 = sphi 0, %s126
      %s144 = sphi 0, %s144
      %s146 = sphi 0, %s144
      %s147 = sphi 0, %s146
      %s161 = sphi 0, %s147
      %s165 = sphi 0, %s165
      %s167 = sphi 0, %s165
      %s168 = sphi 0, %s167
      %s182 = sphi 0, %s168
      %s186 = sphi 0, %s186
      %s188 = sphi 0, %s186
      %s189 = sphi 0, %s188
      %s203 = sphi 0, %s189
      %s209 = sphi 0, %s211
      %s212 = sphi 0, %s209
      %s213 = sphi 0, %s212
      %s229 = sphi 0, %s213
    $region4: #{tpu_custom_call.1} parent=1 // loop_header_branch
      %29 = sbr.rel (%p27) target = $region8
    $region5: #{tpu_custom_call.1} parent=1 // loop_body
      %s31 = ssub.s32 %s26, 1
      %s32 = ssub.s32 %s26, 2
      %s33 = sadd.s32 %s26, 1
      %s34 = ssub.s32 %s26, %s33
      %p35 = scmp.eq.s32.totalorder %s34, 0
      %s37 = sadd.s32 %s36, 1
      %s38 = scalar_select %p35, %s36, %s37
      %p41 = pneg %p35
      %p42 = scmp.eq.s32.totalorder %s26, 1
      %p43 = por %p41, %p42
      %p44 = scmp.ne.s32.totalorder %s36, %s39
      %p45 = scmp.eq.s32.totalorder %s26, 0
      %p46 = por %p44, %p45
      %p47 = scmp.ne.s32.totalorder %s36, %s39
      %p48 = scmp.eq.s32.totalorder %s31, 1
      %p49 = por %p47, %p48
      %p50 = scmp.ne.s32.totalorder %s39, %s40
      %p51 = scmp.eq.s32.totalorder %s31, 0
      %p52 = por %p50, %p51
      %p53 = scmp.ne.s32.totalorder %s39, %s40
      %p54 = scmp.eq.s32.totalorder %s32, 1
      %p55 = por %p53, %p54
      %p57 = scmp.ne.s32.totalorder %s40, %s56
      %p58 = scmp.eq.s32.totalorder %s32, 0
      %p59 = por %p57, %p58
      %s61 = sadd.s32 %s60, 1
      %p64 = scmp.eq.s32.totalorder %s26, 1
      %p65 = scmp.ne.s32.totalorder %s60, %s62
      %p66 = scmp.eq.s32.totalorder %s26, 0
      %p67 = por %p65, %p66
      %p68 = scmp.ne.s32.totalorder %s60, %s62
      %p69 = scmp.eq.s32.totalorder %s31, 1
      %p70 = por %p68, %p69
      %p71 = scmp.ne.s32.totalorder %s62, %s63
      %p72 = scmp.eq.s32.totalorder %s31, 0
      %p73 = por %p71, %p72
      %p74 = scmp.ne.s32.totalorder %s62, %s63
      %p75 = scmp.eq.s32.totalorder %s32, 1
      %p76 = por %p74, %p75
      %p78 = scmp.ne.s32.totalorder %s63, %s77
      %p79 = scmp.eq.s32.totalorder %s32, 0
      %p80 = por %p78, %p79
      %s82 = sadd.s32 %s81, 1
      %p85 = scmp.eq.s32.totalorder %s26, 1
      %p86 = scmp.ne.s32.totalorder %s81, %s83
      %p87 = scmp.eq.s32.totalorder %s26, 0
      %p88 = por %p86, %p87
      %p89 = scmp.ne.s32.totalorder %s81, %s83
      %p90 = scmp.eq.s32.totalorder %s31, 1
      %p91 = por %p89, %p90
      %p92 = scmp.ne.s32.totalorder %s83, %s84
      %p93 = scmp.eq.s32.totalorder %s31, 0
      %p94 = por %p92, %p93
      %p95 = scmp.ne.s32.totalorder %s83, %s84
      %p96 = scmp.eq.s32.totalorder %s32, 1
      %p97 = por %p95, %p96
      %p99 = scmp.ne.s32.totalorder %s84, %s98
      %p100 = scmp.eq.s32.totalorder %s32, 0
      %p101 = por %p99, %p100
      %s103 = sadd.s32 %s102, 1
      %p106 = scmp.eq.s32.totalorder %s26, 1
      %p107 = scmp.ne.s32.totalorder %s102, %s104
      %p108 = scmp.eq.s32.totalorder %s26, 0
      %p109 = por %p107, %p108
      %p110 = scmp.ne.s32.totalorder %s102, %s104
      %p111 = scmp.eq.s32.totalorder %s31, 1
      %p112 = por %p110, %p111
      %p113 = scmp.ne.s32.totalorder %s104, %s105
      %p114 = scmp.eq.s32.totalorder %s31, 0
      %p115 = por %p113, %p114
      %p116 = scmp.ne.s32.totalorder %s104, %s105
      %p117 = scmp.eq.s32.totalorder %s32, 1
      %p118 = por %p116, %p117
      %p120 = scmp.ne.s32.totalorder %s105, %s119
      %p121 = scmp.eq.s32.totalorder %s32, 0
      %p122 = por %p120, %p121
      %s124 = sadd.s32 %s123, 1
      %p127 = scmp.eq.s32.totalorder %s26, 1
      %p128 = scmp.ne.s32.totalorder %s123, %s125
      %p129 = scmp.eq.s32.totalorder %s26, 0
      %p130 = por %p128, %p129
      %p131 = scmp.ne.s32.totalorder %s123, %s125
      %p132 = scmp.eq.s32.totalorder %s31, 1
      %p133 = por %p131, %p132
      %p134 = scmp.ne.s32.totalorder %s125, %s126
      %p135 = scmp.eq.s32.totalorder %s31, 0
      %p136 = por %p134, %p135
      %p137 = scmp.ne.s32.totalorder %s125, %s126
      %p138 = scmp.eq.s32.totalorder %s32, 1
      %p139 = por %p137, %p138
      %p141 = scmp.ne.s32.totalorder %s126, %s140
      %p142 = scmp.eq.s32.totalorder %s32, 0
      %p143 = por %p141, %p142
      %s145 = sadd.s32 %s144, 1
      %p148 = scmp.eq.s32.totalorder %s26, 1
      %p149 = scmp.ne.s32.totalorder %s144, %s146
      %p150 = scmp.eq.s32.totalorder %s26, 0
      %p151 = por %p149, %p150
      %p152 = scmp.ne.s32.totalorder %s144, %s146
      %p153 = scmp.eq.s32.totalorder %s31, 1
      %p154 = por %p152, %p153
      %p155 = scmp.ne.s32.totalorder %s146, %s147
      %p156 = scmp.eq.s32.totalorder %s31, 0
      %p157 = por %p155, %p156
      %p158 = scmp.ne.s32.totalorder %s146, %s147
      %p159 = scmp.eq.s32.totalorder %s32, 1
      %p160 = por %p158, %p159
      %p162 = scmp.ne.s32.totalorder %s147, %s161
      %p163 = scmp.eq.s32.totalorder %s32, 0
      %p164 = por %p162, %p163
      %s166 = sadd.s32 %s165, 1
      %p169 = scmp.eq.s32.totalorder %s26, 1
      %p170 = scmp.ne.s32.totalorder %s165, %s167
      %p171 = scmp.eq.s32.totalorder %s26, 0
      %p172 = por %p170, %p171
      %p173 = scmp.ne.s32.totalorder %s165, %s167
      %p174 = scmp.eq.s32.totalorder %s31, 1
      %p175 = por %p173, %p174
      %p176 = scmp.ne.s32.totalorder %s167, %s168
      %p177 = scmp.eq.s32.totalorder %s31, 0
      %p178 = por %p176, %p177
      %p179 = scmp.ne.s32.totalorder %s167, %s168
      %p180 = scmp.eq.s32.totalorder %s32, 1
      %p181 = por %p179, %p180
      %p183 = scmp.ne.s32.totalorder %s168, %s182
      %p184 = scmp.eq.s32.totalorder %s32, 0
      %p185 = por %p183, %p184
      %s187 = sadd.s32 %s186, 1
      %p190 = scmp.eq.s32.totalorder %s26, 1
      %p191 = scmp.ne.s32.totalorder %s186, %s188
      %p192 = scmp.eq.s32.totalorder %s26, 0
      %p193 = por %p191, %p192
      %p194 = scmp.ne.s32.totalorder %s186, %s188
      %p195 = scmp.eq.s32.totalorder %s31, 1
      %p196 = por %p194, %p195
      %p197 = scmp.ne.s32.totalorder %s188, %s189
      %p198 = scmp.eq.s32.totalorder %s31, 0
      %p199 = por %p197, %p198
      %p200 = scmp.ne.s32.totalorder %s188, %s189
      %p201 = scmp.eq.s32.totalorder %s32, 1
      %p202 = por %p200, %p201
      %p204 = scmp.ne.s32.totalorder %s189, %s203
      %p205 = scmp.eq.s32.totalorder %s32, 0
      %p206 = por %p204, %p205
      %s207 = ssub.s32 %s26, %s33
      %p208 = scmp.eq.s32.totalorder %s207, 0
      %s210 = sadd.s32 %s209, 1
      %s211 = scalar_select %p208, %s209, %s210
      %p214 = pneg %p208
      %p215 = scmp.eq.s32.totalorder %s26, 1
      %p216 = por %p214, %p215
      %p217 = scmp.ne.s32.totalorder %s209, %s212
      %p218 = scmp.eq.s32.totalorder %s26, 0
      %p219 = por %p217, %p218
      %p220 = scmp.ne.s32.totalorder %s209, %s212
      %p221 = scmp.eq.s32.totalorder %s31, 1
      %p222 = por %p220, %p221
      %p223 = scmp.ne.s32.totalorder %s212, %s213
      %p224 = scmp.eq.s32.totalorder %s31, 0
      %p225 = por %p223, %p224
      %p226 = scmp.ne.s32.totalorder %s212, %s213
      %p227 = scmp.eq.s32.totalorder %s32, 1
      %p228 = por %p226, %p227
      %p230 = scmp.ne.s32.totalorder %s213, %s229
      %p231 = scmp.eq.s32.totalorder %s32, 0
      %p232 = por %p230, %p231
      %p233 = scmp.le.s32.totalorder 1, %s26
      %p234 = scmp.lt.s32.totalorder %s26, 3
      %p235 = pnand %p233, %p234
      %p236 = pneg %p235
      // Predicated region
      $region9: #{tpu_custom_call.1} parent=5 // pred_check
        _
      $region10: #{tpu_custom_call.1} parent=5 // pred_check_branch
        %238 = sbr.rel (%p235) target = $region12
      $region11: #{tpu_custom_call.1} parent=5 // pred_region
        %s239 = ssub.s32 %s26, 1
        // Predicated region
        $region13: #{tpu_custom_call.1} parent=11 // pred_check
          %p240 = pneg %p73
        $region14: #{tpu_custom_call.1} parent=11 // pred_check_branch
          %242 = sbr.rel (%p240) target = $region16
        $region15: #{tpu_custom_call.1} parent=11 // pred_region
          _
        $region16: #{tpu_custom_call.1} parent=11 // pred_fallthru
          _
        // Predicated region
        $region17: #{tpu_custom_call.1} parent=11 // pred_check
          %p243 = pneg %p94
        $region18: #{tpu_custom_call.1} parent=11 // pred_check_branch
          %245 = sbr.rel (%p243) target = $region20
        $region19: #{tpu_custom_call.1} parent=11 // pred_region
          _
        $region20: #{tpu_custom_call.1} parent=11 // pred_fallthru
          _
        // Predicated region
        $region21: #{tpu_custom_call.1} parent=11 // pred_check
          %p246 = pneg %p115
        $region22: #{tpu_custom_call.1} parent=11 // pred_check_branch
          %248 = sbr.rel (%p246) target = $region24
        $region23: #{tpu_custom_call.1} parent=11 // pred_region
          _
        $region24: #{tpu_custom_call.1} parent=11 // pred_fallthru
          _
        // Predicated region
        $region25: #{tpu_custom_call.1} parent=11 // pred_check
          %p249 = pneg %p136
        $region26: #{tpu_custom_call.1} parent=11 // pred_check_branch
          %251 = sbr.rel (%p249) target = $region28
        $region27: #{tpu_custom_call.1} parent=11 // pred_region
          _
        $region28: #{tpu_custom_call.1} parent=11 // pred_fallthru
          _
        // Predicated region
        $region29: #{tpu_custom_call.1} parent=11 // pred_check
          %p252 = pneg %p157
        $region30: #{tpu_custom_call.1} parent=11 // pred_check_branch
          %254 = sbr.rel (%p252) target = $region32
        $region31: #{tpu_custom_call.1} parent=11 // pred_region
          _
        $region32: #{tpu_custom_call.1} parent=11 // pred_fallthru
          _
        // Predicated region
        $region33: #{tpu_custom_call.1} parent=11 // pred_check
          %p255 = pneg %p178
        $region34: #{tpu_custom_call.1} parent=11 // pred_check_branch
          %257 = sbr.rel (%p255) target = $region36
        $region35: #{tpu_custom_call.1} parent=11 // pred_region
          _
        $region36: #{tpu_custom_call.1} parent=11 // pred_fallthru
          _
        // Predicated region
        $region37: #{tpu_custom_call.1} parent=11 // pred_check
          %p258 = pneg %p199
        $region38: #{tpu_custom_call.1} parent=11 // pred_check_branch
          %260 = sbr.rel (%p258) target = $region40
        $region39: #{tpu_custom_call.1} parent=11 // pred_region
          _
        $region40: #{tpu_custom_call.1} parent=11 // pred_fallthru
          _
      $region12: #{tpu_custom_call.1} parent=5 // pred_fallthru
        _
      %p261 = scmp.lt.s32.totalorder %s26, 2
      // Predicated region
      $region41: #{tpu_custom_call.1} parent=5 // pred_check
        %p262 = pneg %p261
      $region42: #{tpu_custom_call.1} parent=5 // pred_check_branch
        %264 = sbr.rel (%p262) target = $region44
      $region43: #{tpu_custom_call.1} parent=5 // pred_region
        // Predicated region
        $region45: #{tpu_custom_call.1} parent=43 // pred_check
          %p265 = pneg %p46
        $region46: #{tpu_custom_call.1} parent=43 // pred_check_branch
          %267 = sbr.rel (%p265) target = $region48
        $region47: #{tpu_custom_call.1} parent=43 // pred_region
          %s268 = smul.u32 16, %s26
          %p269 = scmp.lt.s32.totalorder %s268, 31
          %s270 = scalar_select %p269, %s268, 31
          %s271 = smul.addr %s270, 8
          %s272 = scalar_lea.vmem %s1, %s271
          %s273 = smul.u32 16, %s26
        $region48: #{tpu_custom_call.1} parent=43 // pred_fallthru
          _
      $region44: #{tpu_custom_call.1} parent=5 // pred_fallthru
        _
      %p274 = scmp.le.s32.totalorder 1, %s26
      %p275 = scmp.lt.s32.totalorder %s26, 3
      %p276 = pnand %p274, %p275
      %p277 = pneg %p276
      // Predicated region
      $region49: #{tpu_custom_call.1} parent=5 // pred_check
        _
      $region50: #{tpu_custom_call.1} parent=5 // pred_check_branch
        %279 = sbr.rel (%p276) target = $region52
      $region51: #{tpu_custom_call.1} parent=5 // pred_region
        %s280 = ssub.s32 %s26, 1
        %s281 = smul.u32 16, %s31
        %p282 = scmp.lt.s32.totalorder %s281, 31
        %s283 = scalar_select %p282, %s281, 31
        %s284 = smul.addr %s283, 8
        %s285 = scalar_lea.vmem %s1, %s284
        %p286 = pneg %p52
        %p287 = pneg %p49
        %p288 = pneg %p73
        %p289 = pneg %p70
        %p290 = pneg %p94
        %p291 = pneg %p91
        %p292 = pneg %p115
        %p293 = pneg %p112
        %p294 = pneg %p136
        %p295 = pneg %p133
        %p296 = pneg %p157
        %p297 = pneg %p154
        %p298 = pneg %p178
        %p299 = pneg %p175
        %p300 = pneg %p199
        %p301 = pneg %p196
        %p302 = pneg %p225
        %p303 = pneg %p222
        %s304 = sand.u32 %s212, 1
        %s305 = scalar_lea.sflag [#allocation6], %s304
        %s306 = sand.u32 %s212, 1
        %s307 = smul.addr %s306, 128
        %s308 = scalar_lea.vmem [#allocation5], %s307
        %s309 = smul.u32 16, %s31
        %p310 = scmp.lt.s32.totalorder %s309, 31
        %s311 = scalar_select %p310, %s309, 31
        %s312 = smul.addr %s311, 8
        %s313 = scalar_lea.vmem %s1, %s312
        %s314 = smul.u32 16, %s31
        %s315 = smul.u32 16, %s31
        %s316 = smul.u32 %s31, 128
        loop: start=0, step=1, limit=128
        $region53: #{tpu_custom_call.1} parent=51 // loop_pre_header
          _
        $region54: #{tpu_custom_call.1} parent=51 // loop_header
          %s318 = sphi 0, %s322
          %p319 = scmp.ge.s32.totalorder %s318, 128
        $region55: #{tpu_custom_call.1} parent=51 // loop_header_branch
          %321 = sbr.rel (%p319) target = $region59
        $region56: #{tpu_custom_call.1} parent=51 // loop_body
          %s323 = sadd.s32 %s316, %s318
          %s324 = sld [smem:[#allocation4 + %s323]]
          %s325 = scalar_lea.vmem %s2, %s324
          %v326 = vld [vmem:[%s325] sm:$0x1]
          %s327 = scalar_lea.vmem [#allocation2], %s318
          %vm328 = vcmask 16384
          %329 = vst.msk [vmem:[%s327] sm:$0x1] %vm328, %v326
        $region57: #{tpu_custom_call.1} parent=51 // loop_footer
          %s322 = sadd.s32 1, %s318
        $region58: #{tpu_custom_call.1} parent=51 // loop_footer_branch
          %317 = sbr.rel target = $region54
        $region59: #{tpu_custom_call.1} parent=51 // loop_exit
          _
        %v330 = vld [vmem:[#allocation2] sm:$0xff]
        %v331 = vld [vmem:[#allocation2 + $0x8] sm:$0xff]
        %v332 = vld [vmem:[#allocation2 + $0x10] sm:$0xff]
        %v333 = vld [vmem:[#allocation2 + $0x18] sm:$0xff]
        %v334 = vld [vmem:[#allocation2 + $0x20] sm:$0xff]
        %v335 = vld [vmem:[#allocation2 + $0x28] sm:$0xff]
        %v336 = vld [vmem:[#allocation2 + $0x30] sm:$0xff]
        %v337 = vld [vmem:[#allocation2 + $0x38] sm:$0xff]
        %v338 = vld [vmem:[#allocation2 + $0x40] sm:$0xff]
        %v339 = vld [vmem:[#allocation2 + $0x48] sm:$0xff]
        %v340 = vld [vmem:[#allocation2 + $0x50] sm:$0xff]
        %v341 = vld [vmem:[#allocation2 + $0x58] sm:$0xff]
        %v342 = vld [vmem:[#allocation2 + $0x60] sm:$0xff]
        %v343 = vld [vmem:[#allocation2 + $0x68] sm:$0xff]
        %v344 = vld [vmem:[#allocation2 + $0x70] sm:$0xff]
        %v345 = vld [vmem:[#allocation2 + $0x78] sm:$0xff]
        %v346 = vld [vmem:[%s313] sm:$0xff]
        %v347 = vld [vmem:[%s313 + $0x8] sm:$0xff]
        %v348 = vld [vmem:[%s313 + $0x10] sm:$0xff]
        %v349 = vld [vmem:[%s313 + $0x18] sm:$0xff]
        %v350 = vld [vmem:[%s313 + $0x20] sm:$0xff]
        %v351 = vld [vmem:[%s313 + $0x28] sm:$0xff]
        %v352 = vld [vmem:[%s313 + $0x30] sm:$0xff]
        %v353 = vld [vmem:[%s313 + $0x38] sm:$0xff]
        %v354 = vld [vmem:[%s313 + $0x40] sm:$0xff]
        %v355 = vld [vmem:[%s313 + $0x48] sm:$0xff]
        %v356 = vld [vmem:[%s313 + $0x50] sm:$0xff]
        %v357 = vld [vmem:[%s313 + $0x58] sm:$0xff]
        %v358 = vld [vmem:[%s313 + $0x60] sm:$0xff]
        %v359 = vld [vmem:[%s313 + $0x68] sm:$0xff]
        %v360 = vld [vmem:[%s313 + $0x70] sm:$0xff]
        %v361 = vld [vmem:[%s313 + $0x78] sm:$0xff]
        %v362 = vld [vmem:[%s3] sm:$0x3]
        %364 = vset.pattern.permute.xlu0 0
        %365 = vperm.xlu0 %364, %v346
        %v366 = vpop.permute.xlu0 %365
        %369 = vset.pattern.permute.xlu0 0
        %370 = vperm.xlu0 %369, %v347
        %v371 = vpop.permute.xlu0 %370
        %374 = vset.pattern.permute.xlu0 0
        %375 = vperm.xlu0 %374, %v348
        %v376 = vpop.permute.xlu0 %375
        %379 = vset.pattern.permute.xlu0 0
        %380 = vperm.xlu0 %379, %v349
        %v381 = vpop.permute.xlu0 %380
        %384 = vset.pattern.permute.xlu0 0
        %385 = vperm.xlu0 %384, %v350
        %v386 = vpop.permute.xlu0 %385
        %389 = vset.pattern.permute.xlu0 0
        %390 = vperm.xlu0 %389, %v351
        %v391 = vpop.permute.xlu0 %390
        %394 = vset.pattern.permute.xlu0 0
        %395 = vperm.xlu0 %394, %v352
        %v396 = vpop.permute.xlu0 %395
        %399 = vset.pattern.permute.xlu0 0
        %400 = vperm.xlu0 %399, %v353
        %v401 = vpop.permute.xlu0 %400
        %404 = vset.pattern.permute.xlu0 0
        %405 = vperm.xlu0 %404, %v354
        %v406 = vpop.permute.xlu0 %405
        %409 = vset.pattern.permute.xlu0 0
        %410 = vperm.xlu0 %409, %v355
        %v411 = vpop.permute.xlu0 %410
        %414 = vset.pattern.permute.xlu0 0
        %415 = vperm.xlu0 %414, %v356
        %v416 = vpop.permute.xlu0 %415
        %419 = vset.pattern.permute.xlu0 0
        %420 = vperm.xlu0 %419, %v357
        %v421 = vpop.permute.xlu0 %420
        %424 = vset.pattern.permute.xlu0 0
        %425 = vperm.xlu0 %424, %v358
        %v426 = vpop.permute.xlu0 %425
        %429 = vset.pattern.permute.xlu0 0
        %430 = vperm.xlu0 %429, %v359
        %v431 = vpop.permute.xlu0 %430
        %434 = vset.pattern.permute.xlu0 0
        %435 = vperm.xlu0 %434, %v360
        %v436 = vpop.permute.xlu0 %435
        %439 = vset.pattern.permute.xlu0 0
        %440 = vperm.xlu0 %439, %v361
        %v441 = vpop.permute.xlu0 %440
        %v443 = vperm.slane %v362, 0
        %v444 = vmul.f32 %v366, %v443
        %v445 = vmul.f32 %v371, %v443
        %v446 = vmul.f32 %v376, %v443
        %v447 = vmul.f32 %v381, %v443
        %v448 = vmul.f32 %v386, %v443
        %v449 = vmul.f32 %v391, %v443
        %v450 = vmul.f32 %v396, %v443
        %v451 = vmul.f32 %v401, %v443
        %v452 = vmul.f32 %v406, %v443
        %v453 = vmul.f32 %v411, %v443
        %v454 = vmul.f32 %v416, %v443
        %v455 = vmul.f32 %v421, %v443
        %v456 = vmul.f32 %v426, %v443
        %v457 = vmul.f32 %v431, %v443
        %v458 = vmul.f32 %v436, %v443
        %v459 = vmul.f32 %v441, %v443
        %460 = vset.pattern.permute.xlu0 1
        %461 = vperm.xlu0 %460, %v346
        %v462 = vpop.permute.xlu0 %461
        %464 = vset.pattern.permute.xlu0 1
        %465 = vperm.xlu0 %464, %v347
        %v466 = vpop.permute.xlu0 %465
        %468 = vset.pattern.permute.xlu0 1
        %469 = vperm.xlu0 %468, %v348
        %v470 = vpop.permute.xlu0 %469
        %472 = vset.pattern.permute.xlu0 1
        %473 = vperm.xlu0 %472, %v349
        %v474 = vpop.permute.xlu0 %473
        %476 = vset.pattern.permute.xlu0 1
        %477 = vperm.xlu0 %476, %v350
        %v478 = vpop.permute.xlu0 %477
        %480 = vset.pattern.permute.xlu0 1
        %481 = vperm.xlu0 %480, %v351
        %v482 = vpop.permute.xlu0 %481
        %484 = vset.pattern.permute.xlu0 1
        %485 = vperm.xlu0 %484, %v352
        %v486 = vpop.permute.xlu0 %485
        %488 = vset.pattern.permute.xlu0 1
        %489 = vperm.xlu0 %488, %v353
        %v490 = vpop.permute.xlu0 %489
        %492 = vset.pattern.permute.xlu0 1
        %493 = vperm.xlu0 %492, %v354
        %v494 = vpop.permute.xlu0 %493
        %496 = vset.pattern.permute.xlu0 1
        %497 = vperm.xlu0 %496, %v355
        %v498 = vpop.permute.xlu0 %497
        %500 = vset.pattern.permute.xlu0 1
        %501 = vperm.xlu0 %500, %v356
        %v502 = vpop.permute.xlu0 %501
        %504 = vset.pattern.permute.xlu0 1
        %505 = vperm.xlu0 %504, %v357
        %v506 = vpop.permute.xlu0 %505
        %508 = vset.pattern.permute.xlu0 1
        %509 = vperm.xlu0 %508, %v358
        %v510 = vpop.permute.xlu0 %509
        %512 = vset.pattern.permute.xlu0 1
        %513 = vperm.xlu0 %512, %v359
        %v514 = vpop.permute.xlu0 %513
        %516 = vset.pattern.permute.xlu0 1
        %517 = vperm.xlu0 %516, %v360
        %v518 = vpop.permute.xlu0 %517
        %520 = vset.pattern.permute.xlu0 1
        %521 = vperm.xlu0 %520, %v361
        %v522 = vpop.permute.xlu0 %521
        %v524 = vperm.slane %v362, 1
        %v525 = vmul.f32 %v462, %v524
        %v526 = vmul.f32 %v466, %v524
        %v527 = vmul.f32 %v470, %v524
        %v528 = vmul.f32 %v474, %v524
        %v529 = vmul.f32 %v478, %v524
        %v530 = vmul.f32 %v482, %v524
        %v531 = vmul.f32 %v486, %v524
        %v532 = vmul.f32 %v490, %v524
        %v533 = vmul.f32 %v494, %v524
        %v534 = vmul.f32 %v498, %v524
        %v535 = vmul.f32 %v502, %v524
        %v536 = vmul.f32 %v506, %v524
        %v537 = vmul.f32 %v510, %v524
        %v538 = vmul.f32 %v514, %v524
        %v539 = vmul.f32 %v518, %v524
        %v540 = vmul.f32 %v522, %v524
        %v541 = vadd.f32 %v444, %v525
        %v542 = vadd.f32 %v445, %v526
        %v543 = vadd.f32 %v446, %v527
        %v544 = vadd.f32 %v447, %v528
        %v545 = vadd.f32 %v448, %v529
        %v546 = vadd.f32 %v449, %v530
        %v547 = vadd.f32 %v450, %v531
        %v548 = vadd.f32 %v451, %v532
        %v549 = vadd.f32 %v452, %v533
        %v550 = vadd.f32 %v453, %v534
        %v551 = vadd.f32 %v454, %v535
        %v552 = vadd.f32 %v455, %v536
        %v553 = vadd.f32 %v456, %v537
        %v554 = vadd.f32 %v457, %v538
        %v555 = vadd.f32 %v458, %v539
        %v556 = vadd.f32 %v459, %v540
        %v557 = vld [vmem:[%s4] sm:$0x1]
        %v559 = vperm.slane %v557, 0
        %v561 = vadd.f32 %v541, %v559
        %v562 = vadd.f32 %v542, %v559
        %v563 = vadd.f32 %v543, %v559
        %v564 = vadd.f32 %v544, %v559
        %v565 = vadd.f32 %v545, %v559
        %v566 = vadd.f32 %v546, %v559
        %v567 = vadd.f32 %v547, %v559
        %v568 = vadd.f32 %v548, %v559
        %v569 = vadd.f32 %v549, %v559
        %v570 = vadd.f32 %v550, %v559
        %v571 = vadd.f32 %v551, %v559
        %v572 = vadd.f32 %v552, %v559
        %v573 = vadd.f32 %v553, %v559
        %v574 = vadd.f32 %v554, %v559
        %v575 = vadd.f32 %v555, %v559
        %v576 = vadd.f32 %v556, %v559
        %v577 = vld [vmem:[%s5] sm:$0x1f]
        %579 = vset.pattern.permute.xlu0 0
        %580 = vperm.xlu0 %579, %v561
        %v581 = vpop.permute.xlu0 %580
        %584 = vset.pattern.permute.xlu0 0
        %585 = vperm.xlu0 %584, %v562
        %v586 = vpop.permute.xlu0 %585
        %589 = vset.pattern.permute.xlu0 0
        %590 = vperm.xlu0 %589, %v563
        %v591 = vpop.permute.xlu0 %590
        %594 = vset.pattern.permute.xlu0 0
        %595 = vperm.xlu0 %594, %v564
        %v596 = vpop.permute.xlu0 %595
        %599 = vset.pattern.permute.xlu0 0
        %600 = vperm.xlu0 %599, %v565
        %v601 = vpop.permute.xlu0 %600
        %604 = vset.pattern.permute.xlu0 0
        %605 = vperm.xlu0 %604, %v566
        %v606 = vpop.permute.xlu0 %605
        %609 = vset.pattern.permute.xlu0 0
        %610 = vperm.xlu0 %609, %v567
        %v611 = vpop.permute.xlu0 %610
        %614 = vset.pattern.permute.xlu0 0
        %615 = vperm.xlu0 %614, %v568
        %v616 = vpop.permute.xlu0 %615
        %619 = vset.pattern.permute.xlu0 0
        %620 = vperm.xlu0 %619, %v569
        %v621 = vpop.permute.xlu0 %620
        %624 = vset.pattern.permute.xlu0 0
        %625 = vperm.xlu0 %624, %v570
        %v626 = vpop.permute.xlu0 %625
        %629 = vset.pattern.permute.xlu0 0
        %630 = vperm.xlu0 %629, %v571
        %v631 = vpop.permute.xlu0 %630
        %634 = vset.pattern.permute.xlu0 0
        %635 = vperm.xlu0 %634, %v572
        %v636 = vpop.permute.xlu0 %635
        %639 = vset.pattern.permute.xlu0 0
        %640 = vperm.xlu0 %639, %v573
        %v641 = vpop.permute.xlu0 %640
        %644 = vset.pattern.permute.xlu0 0
        %645 = vperm.xlu0 %644, %v574
        %v646 = vpop.permute.xlu0 %645
        %649 = vset.pattern.permute.xlu0 0
        %650 = vperm.xlu0 %649, %v575
        %v651 = vpop.permute.xlu0 %650
        %654 = vset.pattern.permute.xlu0 0
        %655 = vperm.xlu0 %654, %v576
        %v656 = vpop.permute.xlu0 %655
        %v658 = vperm.slane %v577, 0
        %v659 = vmul.f32 %v581, %v658
        %v660 = vmul.f32 %v586, %v658
        %v661 = vmul.f32 %v591, %v658
        %v662 = vmul.f32 %v596, %v658
        %v663 = vmul.f32 %v601, %v658
        %v664 = vmul.f32 %v606, %v658
        %v665 = vmul.f32 %v611, %v658
        %v666 = vmul.f32 %v616, %v658
        %v667 = vmul.f32 %v621, %v658
        %v668 = vmul.f32 %v626, %v658
        %v669 = vmul.f32 %v631, %v658
        %v670 = vmul.f32 %v636, %v658
        %v671 = vmul.f32 %v641, %v658
        %v672 = vmul.f32 %v646, %v658
        %v673 = vmul.f32 %v651, %v658
        %v674 = vmul.f32 %v656, %v658
        %675 = vset.pattern.permute.xlu0 1
        %676 = vperm.xlu0 %675, %v561
        %v677 = vpop.permute.xlu0 %676
        %679 = vset.pattern.permute.xlu0 1
        %680 = vperm.xlu0 %679, %v562
        %v681 = vpop.permute.xlu0 %680
        %683 = vset.pattern.permute.xlu0 1
        %684 = vperm.xlu0 %683, %v563
        %v685 = vpop.permute.xlu0 %684
        %687 = vset.pattern.permute.xlu0 1
        %688 = vperm.xlu0 %687, %v564
        %v689 = vpop.permute.xlu0 %688
        %691 = vset.pattern.permute.xlu0 1
        %692 = vperm.xlu0 %691, %v565
        %v693 = vpop.permute.xlu0 %692
        %695 = vset.pattern.permute.xlu0 1
        %696 = vperm.xlu0 %695, %v566
        %v697 = vpop.permute.xlu0 %696
        %699 = vset.pattern.permute.xlu0 1
        %700 = vperm.xlu0 %699, %v567
        %v701 = vpop.permute.xlu0 %700
        %703 = vset.pattern.permute.xlu0 1
        %704 = vperm.xlu0 %703, %v568
        %v705 = vpop.permute.xlu0 %704
        %707 = vset.pattern.permute.xlu0 1
        %708 = vperm.xlu0 %707, %v569
        %v709 = vpop.permute.xlu0 %708
        %711 = vset.pattern.permute.xlu0 1
        %712 = vperm.xlu0 %711, %v570
        %v713 = vpop.permute.xlu0 %712
        %715 = vset.pattern.permute.xlu0 1
        %716 = vperm.xlu0 %715, %v571
        %v717 = vpop.permute.xlu0 %716
        %719 = vset.pattern.permute.xlu0 1
        %720 = vperm.xlu0 %719, %v572
        %v721 = vpop.permute.xlu0 %720
        %723 = vset.pattern.permute.xlu0 1
        %724 = vperm.xlu0 %723, %v573
        %v725 = vpop.permute.xlu0 %724
        %727 = vset.pattern.permute.xlu0 1
        %728 = vperm.xlu0 %727, %v574
        %v729 = vpop.permute.xlu0 %728
        %731 = vset.pattern.permute.xlu0 1
        %732 = vperm.xlu0 %731, %v575
        %v733 = vpop.permute.xlu0 %732
        %735 = vset.pattern.permute.xlu0 1
        %736 = vperm.xlu0 %735, %v576
        %v737 = vpop.permute.xlu0 %736
        %v739 = vperm.slane %v577, 1
        %v740 = vmul.f32 %v677, %v739
        %v741 = vmul.f32 %v681, %v739
        %v742 = vmul.f32 %v685, %v739
        %v743 = vmul.f32 %v689, %v739
        %v744 = vmul.f32 %v693, %v739
        %v745 = vmul.f32 %v697, %v739
        %v746 = vmul.f32 %v701, %v739
        %v747 = vmul.f32 %v705, %v739
        %v748 = vmul.f32 %v709, %v739
        %v749 = vmul.f32 %v713, %v739
        %v750 = vmul.f32 %v717, %v739
        %v751 = vmul.f32 %v721, %v739
        %v752 = vmul.f32 %v725, %v739
        %v753 = vmul.f32 %v729, %v739
        %v754 = vmul.f32 %v733, %v739
        %v755 = vmul.f32 %v737, %v739
        %v756 = vadd.f32 %v659, %v740
        %v757 = vadd.f32 %v660, %v741
        %v758 = vadd.f32 %v661, %v742
        %v759 = vadd.f32 %v662, %v743
        %v760 = vadd.f32 %v663, %v744
        %v761 = vadd.f32 %v664, %v745
        %v762 = vadd.f32 %v665, %v746
        %v763 = vadd.f32 %v666, %v747
        %v764 = vadd.f32 %v667, %v748
        %v765 = vadd.f32 %v668, %v749
        %v766 = vadd.f32 %v669, %v750
        %v767 = vadd.f32 %v670, %v751
        %v768 = vadd.f32 %v671, %v752
        %v769 = vadd.f32 %v672, %v753
        %v770 = vadd.f32 %v673, %v754
        %v771 = vadd.f32 %v674, %v755
        %773 = vset.pattern.permute.xlu0 0
        %774 = vperm.xlu0 %773, %v330
        %v775 = vpop.permute.xlu0 %774
        %778 = vset.pattern.permute.xlu0 0
        %779 = vperm.xlu0 %778, %v331
        %v780 = vpop.permute.xlu0 %779
        %783 = vset.pattern.permute.xlu0 0
        %784 = vperm.xlu0 %783, %v332
        %v785 = vpop.permute.xlu0 %784
        %788 = vset.pattern.permute.xlu0 0
        %789 = vperm.xlu0 %788, %v333
        %v790 = vpop.permute.xlu0 %789
        %793 = vset.pattern.permute.xlu0 0
        %794 = vperm.xlu0 %793, %v334
        %v795 = vpop.permute.xlu0 %794
        %798 = vset.pattern.permute.xlu0 0
        %799 = vperm.xlu0 %798, %v335
        %v800 = vpop.permute.xlu0 %799
        %803 = vset.pattern.permute.xlu0 0
        %804 = vperm.xlu0 %803, %v336
        %v805 = vpop.permute.xlu0 %804
        %808 = vset.pattern.permute.xlu0 0
        %809 = vperm.xlu0 %808, %v337
        %v810 = vpop.permute.xlu0 %809
        %813 = vset.pattern.permute.xlu0 0
        %814 = vperm.xlu0 %813, %v338
        %v815 = vpop.permute.xlu0 %814
        %818 = vset.pattern.permute.xlu0 0
        %819 = vperm.xlu0 %818, %v339
        %v820 = vpop.permute.xlu0 %819
        %823 = vset.pattern.permute.xlu0 0
        %824 = vperm.xlu0 %823, %v340
        %v825 = vpop.permute.xlu0 %824
        %828 = vset.pattern.permute.xlu0 0
        %829 = vperm.xlu0 %828, %v341
        %v830 = vpop.permute.xlu0 %829
        %833 = vset.pattern.permute.xlu0 0
        %834 = vperm.xlu0 %833, %v342
        %v835 = vpop.permute.xlu0 %834
        %838 = vset.pattern.permute.xlu0 0
        %839 = vperm.xlu0 %838, %v343
        %v840 = vpop.permute.xlu0 %839
        %843 = vset.pattern.permute.xlu0 0
        %844 = vperm.xlu0 %843, %v344
        %v845 = vpop.permute.xlu0 %844
        %848 = vset.pattern.permute.xlu0 0
        %849 = vperm.xlu0 %848, %v345
        %v850 = vpop.permute.xlu0 %849
        %v852 = vperm.slane %v577, 2
        %v853 = vmul.f32 %v775, %v852
        %v854 = vmul.f32 %v780, %v852
        %v855 = vmul.f32 %v785, %v852
        %v856 = vmul.f32 %v790, %v852
        %v857 = vmul.f32 %v795, %v852
        %v858 = vmul.f32 %v800, %v852
        %v859 = vmul.f32 %v805, %v852
        %v860 = vmul.f32 %v810, %v852
        %v861 = vmul.f32 %v815, %v852
        %v862 = vmul.f32 %v820, %v852
        %v863 = vmul.f32 %v825, %v852
        %v864 = vmul.f32 %v830, %v852
        %v865 = vmul.f32 %v835, %v852
        %v866 = vmul.f32 %v840, %v852
        %v867 = vmul.f32 %v845, %v852
        %v868 = vmul.f32 %v850, %v852
        %869 = vset.pattern.permute.xlu0 1
        %870 = vperm.xlu0 %869, %v330
        %v871 = vpop.permute.xlu0 %870
        %873 = vset.pattern.permute.xlu0 1
        %874 = vperm.xlu0 %873, %v331
        %v875 = vpop.permute.xlu0 %874
        %877 = vset.pattern.permute.xlu0 1
        %878 = vperm.xlu0 %877, %v332
        %v879 = vpop.permute.xlu0 %878
        %881 = vset.pattern.permute.xlu0 1
        %882 = vperm.xlu0 %881, %v333
        %v883 = vpop.permute.xlu0 %882
        %885 = vset.pattern.permute.xlu0 1
        %886 = vperm.xlu0 %885, %v334
        %v887 = vpop.permute.xlu0 %886
        %889 = vset.pattern.permute.xlu0 1
        %890 = vperm.xlu0 %889, %v335
        %v891 = vpop.permute.xlu0 %890
        %893 = vset.pattern.permute.xlu0 1
        %894 = vperm.xlu0 %893, %v336
        %v895 = vpop.permute.xlu0 %894
        %897 = vset.pattern.permute.xlu0 1
        %898 = vperm.xlu0 %897, %v337
        %v899 = vpop.permute.xlu0 %898
        %901 = vset.pattern.permute.xlu0 1
        %902 = vperm.xlu0 %901, %v338
        %v903 = vpop.permute.xlu0 %902
        %905 = vset.pattern.permute.xlu0 1
        %906 = vperm.xlu0 %905, %v339
        %v907 = vpop.permute.xlu0 %906
        %909 = vset.pattern.permute.xlu0 1
        %910 = vperm.xlu0 %909, %v340
        %v911 = vpop.permute.xlu0 %910
        %913 = vset.pattern.permute.xlu0 1
        %914 = vperm.xlu0 %913, %v341
        %v915 = vpop.permute.xlu0 %914
        %917 = vset.pattern.permute.xlu0 1
        %918 = vperm.xlu0 %917, %v342
        %v919 = vpop.permute.xlu0 %918
        %921 = vset.pattern.permute.xlu0 1
        %922 = vperm.xlu0 %921, %v343
        %v923 = vpop.permute.xlu0 %922
        %925 = vset.pattern.permute.xlu0 1
        %926 = vperm.xlu0 %925, %v344
        %v927 = vpop.permute.xlu0 %926
        %929 = vset.pattern.permute.xlu0 1
        %930 = vperm.xlu0 %929, %v345
        %v931 = vpop.permute.xlu0 %930
        %v933 = vperm.slane %v577, 3
        %v934 = vmul.f32 %v871, %v933
        %v935 = vmul.f32 %v875, %v933
        %v936 = vmul.f32 %v879, %v933
        %v937 = vmul.f32 %v883, %v933
        %v938 = vmul.f32 %v887, %v933
        %v939 = vmul.f32 %v891, %v933
        %v940 = vmul.f32 %v895, %v933
        %v941 = vmul.f32 %v899, %v933
        %v942 = vmul.f32 %v903, %v933
        %v943 = vmul.f32 %v907, %v933
        %v944 = vmul.f32 %v911, %v933
        %v945 = vmul.f32 %v915, %v933
        %v946 = vmul.f32 %v919, %v933
        %v947 = vmul.f32 %v923, %v933
        %v948 = vmul.f32 %v927, %v933
        %v949 = vmul.f32 %v931, %v933
        %v950 = vadd.f32 %v853, %v934
        %v951 = vadd.f32 %v854, %v935
        %v952 = vadd.f32 %v855, %v936
        %v953 = vadd.f32 %v856, %v937
        %v954 = vadd.f32 %v857, %v938
        %v955 = vadd.f32 %v858, %v939
        %v956 = vadd.f32 %v859, %v940
        %v957 = vadd.f32 %v860, %v941
        %v958 = vadd.f32 %v861, %v942
        %v959 = vadd.f32 %v862, %v943
        %v960 = vadd.f32 %v863, %v944
        %v961 = vadd.f32 %v864, %v945
        %v962 = vadd.f32 %v865, %v946
        %v963 = vadd.f32 %v866, %v947
        %v964 = vadd.f32 %v867, %v948
        %v965 = vadd.f32 %v868, %v949
        %966 = vset.pattern.permute.xlu0 2
        %967 = vperm.xlu0 %966, %v330
        %v968 = vpop.permute.xlu0 %967
        %970 = vset.pattern.permute.xlu0 2
        %971 = vperm.xlu0 %970, %v331
        %v972 = vpop.permute.xlu0 %971
        %974 = vset.pattern.permute.xlu0 2
        %975 = vperm.xlu0 %974, %v332
        %v976 = vpop.permute.xlu0 %975
        %978 = vset.pattern.permute.xlu0 2
        %979 = vperm.xlu0 %978, %v333
        %v980 = vpop.permute.xlu0 %979
        %982 = vset.pattern.permute.xlu0 2
        %983 = vperm.xlu0 %982, %v334
        %v984 = vpop.permute.xlu0 %983
        %986 = vset.pattern.permute.xlu0 2
        %987 = vperm.xlu0 %986, %v335
        %v988 = vpop.permute.xlu0 %987
        %990 = vset.pattern.permute.xlu0 2
        %991 = vperm.xlu0 %990, %v336
        %v992 = vpop.permute.xlu0 %991
        %994 = vset.pattern.permute.xlu0 2
        %995 = vperm.xlu0 %994, %v337
        %v996 = vpop.permute.xlu0 %995
        %998 = vset.pattern.permute.xlu0 2
        %999 = vperm.xlu0 %998, %v338
        %v1000 = vpop.permute.xlu0 %999
        %1002 = vset.pattern.permute.xlu0 2
        %1003 = vperm.xlu0 %1002, %v339
        %v1004 = vpop.permute.xlu0 %1003
        %1006 = vset.pattern.permute.xlu0 2
        %1007 = vperm.xlu0 %1006, %v340
        %v1008 = vpop.permute.xlu0 %1007
        %1010 = vset.pattern.permute.xlu0 2
        %1011 = vperm.xlu0 %1010, %v341
        %v1012 = vpop.permute.xlu0 %1011
        %1014 = vset.pattern.permute.xlu0 2
        %1015 = vperm.xlu0 %1014, %v342
        %v1016 = vpop.permute.xlu0 %1015
        %1018 = vset.pattern.permute.xlu0 2
        %1019 = vperm.xlu0 %1018, %v343
        %v1020 = vpop.permute.xlu0 %1019
        %1022 = vset.pattern.permute.xlu0 2
        %1023 = vperm.xlu0 %1022, %v344
        %v1024 = vpop.permute.xlu0 %1023
        %1026 = vset.pattern.permute.xlu0 2
        %1027 = vperm.xlu0 %1026, %v345
        %v1028 = vpop.permute.xlu0 %1027
        %v1030 = vperm.slane %v577, 4
        %v1031 = vmul.f32 %v968, %v1030
        %v1032 = vmul.f32 %v972, %v1030
        %v1033 = vmul.f32 %v976, %v1030
        %v1034 = vmul.f32 %v980, %v1030
        %v1035 = vmul.f32 %v984, %v1030
        %v1036 = vmul.f32 %v988, %v1030
        %v1037 = vmul.f32 %v992, %v1030
        %v1038 = vmul.f32 %v996, %v1030
        %v1039 = vmul.f32 %v1000, %v1030
        %v1040 = vmul.f32 %v1004, %v1030
        %v1041 = vmul.f32 %v1008, %v1030
        %v1042 = vmul.f32 %v1012, %v1030
        %v1043 = vmul.f32 %v1016, %v1030
        %v1044 = vmul.f32 %v1020, %v1030
        %v1045 = vmul.f32 %v1024, %v1030
        %v1046 = vmul.f32 %v1028, %v1030
        %v1047 = vadd.f32 %v950, %v1031
        %v1048 = vadd.f32 %v951, %v1032
        %v1049 = vadd.f32 %v952, %v1033
        %v1050 = vadd.f32 %v953, %v1034
        %v1051 = vadd.f32 %v954, %v1035
        %v1052 = vadd.f32 %v955, %v1036
        %v1053 = vadd.f32 %v956, %v1037
        %v1054 = vadd.f32 %v957, %v1038
        %v1055 = vadd.f32 %v958, %v1039
        %v1056 = vadd.f32 %v959, %v1040
        %v1057 = vadd.f32 %v960, %v1041
        %v1058 = vadd.f32 %v961, %v1042
        %v1059 = vadd.f32 %v962, %v1043
        %v1060 = vadd.f32 %v963, %v1044
        %v1061 = vadd.f32 %v964, %v1045
        %v1062 = vadd.f32 %v965, %v1046
        %v1063 = vadd.f32 %v756, %v1047
        %v1064 = vadd.f32 %v757, %v1048
        %v1065 = vadd.f32 %v758, %v1049
        %v1066 = vadd.f32 %v759, %v1050
        %v1067 = vadd.f32 %v760, %v1051
        %v1068 = vadd.f32 %v761, %v1052
        %v1069 = vadd.f32 %v762, %v1053
        %v1070 = vadd.f32 %v763, %v1054
        %v1071 = vadd.f32 %v764, %v1055
        %v1072 = vadd.f32 %v765, %v1056
        %v1073 = vadd.f32 %v766, %v1057
        %v1074 = vadd.f32 %v767, %v1058
        %v1075 = vadd.f32 %v768, %v1059
        %v1076 = vadd.f32 %v769, %v1060
        %v1077 = vadd.f32 %v770, %v1061
        %v1078 = vadd.f32 %v771, %v1062
        %v1079 = vld [vmem:[%s6] sm:$0x1]
        %v1081 = vperm.slane %v1079, 0
        %v1083 = vadd.f32 %v1063, %v1081
        %v1084 = vadd.f32 %v1064, %v1081
        %v1085 = vadd.f32 %v1065, %v1081
        %v1086 = vadd.f32 %v1066, %v1081
        %v1087 = vadd.f32 %v1067, %v1081
        %v1088 = vadd.f32 %v1068, %v1081
        %v1089 = vadd.f32 %v1069, %v1081
        %v1090 = vadd.f32 %v1070, %v1081
        %v1091 = vadd.f32 %v1071, %v1081
        %v1092 = vadd.f32 %v1072, %v1081
        %v1093 = vadd.f32 %v1073, %v1081
        %v1094 = vadd.f32 %v1074, %v1081
        %v1095 = vadd.f32 %v1075, %v1081
        %v1096 = vadd.f32 %v1076, %v1081
        %v1097 = vadd.f32 %v1077, %v1081
        %v1098 = vadd.f32 %v1078, %v1081
        %v1099 = vmax.f32 %v1083, 0.0
        %v1100 = vmax.f32 %v1084, 0.0
        %v1101 = vmax.f32 %v1085, 0.0
        %v1102 = vmax.f32 %v1086, 0.0
        %v1103 = vmax.f32 %v1087, 0.0
        %v1104 = vmax.f32 %v1088, 0.0
        %v1105 = vmax.f32 %v1089, 0.0
        %v1106 = vmax.f32 %v1090, 0.0
        %v1107 = vmax.f32 %v1091, 0.0
        %v1108 = vmax.f32 %v1092, 0.0
        %v1109 = vmax.f32 %v1093, 0.0
        %v1110 = vmax.f32 %v1094, 0.0
        %v1111 = vmax.f32 %v1095, 0.0
        %v1112 = vmax.f32 %v1096, 0.0
        %v1113 = vmax.f32 %v1097, 0.0
        %v1114 = vmax.f32 %v1098, 0.0
        %v1115 = vld [vmem:[%s7] sm:$0x7]
        %1117 = vset.pattern.permute.xlu0 0
        %1118 = vperm.xlu0 %1117, %v1099
        %v1119 = vpop.permute.xlu0 %1118
        %1122 = vset.pattern.permute.xlu0 0
        %1123 = vperm.xlu0 %1122, %v1100
        %v1124 = vpop.permute.xlu0 %1123
        %1127 = vset.pattern.permute.xlu0 0
        %1128 = vperm.xlu0 %1127, %v1101
        %v1129 = vpop.permute.xlu0 %1128
        %1132 = vset.pattern.permute.xlu0 0
        %1133 = vperm.xlu0 %1132, %v1102
        %v1134 = vpop.permute.xlu0 %1133
        %1137 = vset.pattern.permute.xlu0 0
        %1138 = vperm.xlu0 %1137, %v1103
        %v1139 = vpop.permute.xlu0 %1138
        %1142 = vset.pattern.permute.xlu0 0
        %1143 = vperm.xlu0 %1142, %v1104
        %v1144 = vpop.permute.xlu0 %1143
        %1147 = vset.pattern.permute.xlu0 0
        %1148 = vperm.xlu0 %1147, %v1105
        %v1149 = vpop.permute.xlu0 %1148
        %1152 = vset.pattern.permute.xlu0 0
        %1153 = vperm.xlu0 %1152, %v1106
        %v1154 = vpop.permute.xlu0 %1153
        %1157 = vset.pattern.permute.xlu0 0
        %1158 = vperm.xlu0 %1157, %v1107
        %v1159 = vpop.permute.xlu0 %1158
        %1162 = vset.pattern.permute.xlu0 0
        %1163 = vperm.xlu0 %1162, %v1108
        %v1164 = vpop.permute.xlu0 %1163
        %1167 = vset.pattern.permute.xlu0 0
        %1168 = vperm.xlu0 %1167, %v1109
        %v1169 = vpop.permute.xlu0 %1168
        %1172 = vset.pattern.permute.xlu0 0
        %1173 = vperm.xlu0 %1172, %v1110
        %v1174 = vpop.permute.xlu0 %1173
        %1177 = vset.pattern.permute.xlu0 0
        %1178 = vperm.xlu0 %1177, %v1111
        %v1179 = vpop.permute.xlu0 %1178
        %1182 = vset.pattern.permute.xlu0 0
        %1183 = vperm.xlu0 %1182, %v1112
        %v1184 = vpop.permute.xlu0 %1183
        %1187 = vset.pattern.permute.xlu0 0
        %1188 = vperm.xlu0 %1187, %v1113
        %v1189 = vpop.permute.xlu0 %1188
        %1192 = vset.pattern.permute.xlu0 0
        %1193 = vperm.xlu0 %1192, %v1114
        %v1194 = vpop.permute.xlu0 %1193
        %v1196 = vperm.slane %v1115, 0
        %v1197 = vmul.f32 %v1119, %v1196
        %v1198 = vmul.f32 %v1124, %v1196
        %v1199 = vmul.f32 %v1129, %v1196
        %v1200 = vmul.f32 %v1134, %v1196
        %v1201 = vmul.f32 %v1139, %v1196
        %v1202 = vmul.f32 %v1144, %v1196
        %v1203 = vmul.f32 %v1149, %v1196
        %v1204 = vmul.f32 %v1154, %v1196
        %v1205 = vmul.f32 %v1159, %v1196
        %v1206 = vmul.f32 %v1164, %v1196
        %v1207 = vmul.f32 %v1169, %v1196
        %v1208 = vmul.f32 %v1174, %v1196
        %v1209 = vmul.f32 %v1179, %v1196
        %v1210 = vmul.f32 %v1184, %v1196
        %v1211 = vmul.f32 %v1189, %v1196
        %v1212 = vmul.f32 %v1194, %v1196
        %1213 = vset.pattern.permute.xlu0 1
        %1214 = vperm.xlu0 %1213, %v1099
        %v1215 = vpop.permute.xlu0 %1214
        %1217 = vset.pattern.permute.xlu0 1
        %1218 = vperm.xlu0 %1217, %v1100
        %v1219 = vpop.permute.xlu0 %1218
        %1221 = vset.pattern.permute.xlu0 1
        %1222 = vperm.xlu0 %1221, %v1101
        %v1223 = vpop.permute.xlu0 %1222
        %1225 = vset.pattern.permute.xlu0 1
        %1226 = vperm.xlu0 %1225, %v1102
        %v1227 = vpop.permute.xlu0 %1226
        %1229 = vset.pattern.permute.xlu0 1
        %1230 = vperm.xlu0 %1229, %v1103
        %v1231 = vpop.permute.xlu0 %1230
        %1233 = vset.pattern.permute.xlu0 1
        %1234 = vperm.xlu0 %1233, %v1104
        %v1235 = vpop.permute.xlu0 %1234
        %1237 = vset.pattern.permute.xlu0 1
        %1238 = vperm.xlu0 %1237, %v1105
        %v1239 = vpop.permute.xlu0 %1238
        %1241 = vset.pattern.permute.xlu0 1
        %1242 = vperm.xlu0 %1241, %v1106
        %v1243 = vpop.permute.xlu0 %1242
        %1245 = vset.pattern.permute.xlu0 1
        %1246 = vperm.xlu0 %1245, %v1107
        %v1247 = vpop.permute.xlu0 %1246
        %1249 = vset.pattern.permute.xlu0 1
        %1250 = vperm.xlu0 %1249, %v1108
        %v1251 = vpop.permute.xlu0 %1250
        %1253 = vset.pattern.permute.xlu0 1
        %1254 = vperm.xlu0 %1253, %v1109
        %v1255 = vpop.permute.xlu0 %1254
        %1257 = vset.pattern.permute.xlu0 1
        %1258 = vperm.xlu0 %1257, %v1110
        %v1259 = vpop.permute.xlu0 %1258
        %1261 = vset.pattern.permute.xlu0 1
        %1262 = vperm.xlu0 %1261, %v1111
        %v1263 = vpop.permute.xlu0 %1262
        %1265 = vset.pattern.permute.xlu0 1
        %1266 = vperm.xlu0 %1265, %v1112
        %v1267 = vpop.permute.xlu0 %1266
        %1269 = vset.pattern.permute.xlu0 1
        %1270 = vperm.xlu0 %1269, %v1113
        %v1271 = vpop.permute.xlu0 %1270
        %1273 = vset.pattern.permute.xlu0 1
        %1274 = vperm.xlu0 %1273, %v1114
        %v1275 = vpop.permute.xlu0 %1274
        %v1277 = vperm.slane %v1115, 1
        %v1278 = vmul.f32 %v1215, %v1277
        %v1279 = vmul.f32 %v1219, %v1277
        %v1280 = vmul.f32 %v1223, %v1277
        %v1281 = vmul.f32 %v1227, %v1277
        %v1282 = vmul.f32 %v1231, %v1277
        %v1283 = vmul.f32 %v1235, %v1277
        %v1284 = vmul.f32 %v1239, %v1277
        %v1285 = vmul.f32 %v1243, %v1277
        %v1286 = vmul.f32 %v1247, %v1277
        %v1287 = vmul.f32 %v1251, %v1277
        %v1288 = vmul.f32 %v1255, %v1277
        %v1289 = vmul.f32 %v1259, %v1277
        %v1290 = vmul.f32 %v1263, %v1277
        %v1291 = vmul.f32 %v1267, %v1277
        %v1292 = vmul.f32 %v1271, %v1277
        %v1293 = vmul.f32 %v1275, %v1277
        %v1294 = vadd.f32 %v1197, %v1278
        %v1295 = vadd.f32 %v1198, %v1279
        %v1296 = vadd.f32 %v1199, %v1280
        %v1297 = vadd.f32 %v1200, %v1281
        %v1298 = vadd.f32 %v1201, %v1282
        %v1299 = vadd.f32 %v1202, %v1283
        %v1300 = vadd.f32 %v1203, %v1284
        %v1301 = vadd.f32 %v1204, %v1285
        %v1302 = vadd.f32 %v1205, %v1286
        %v1303 = vadd.f32 %v1206, %v1287
        %v1304 = vadd.f32 %v1207, %v1288
        %v1305 = vadd.f32 %v1208, %v1289
        %v1306 = vadd.f32 %v1209, %v1290
        %v1307 = vadd.f32 %v1210, %v1291
        %v1308 = vadd.f32 %v1211, %v1292
        %v1309 = vadd.f32 %v1212, %v1293
        %1310 = vset.pattern.permute.xlu0 2
        %1311 = vperm.xlu0 %1310, %v1099
        %v1312 = vpop.permute.xlu0 %1311
        %1314 = vset.pattern.permute.xlu0 2
        %1315 = vperm.xlu0 %1314, %v1100
        %v1316 = vpop.permute.xlu0 %1315
        %1318 = vset.pattern.permute.xlu0 2
        %1319 = vperm.xlu0 %1318, %v1101
        %v1320 = vpop.permute.xlu0 %1319
        %1322 = vset.pattern.permute.xlu0 2
        %1323 = vperm.xlu0 %1322, %v1102
        %v1324 = vpop.permute.xlu0 %1323
        %1326 = vset.pattern.permute.xlu0 2
        %1327 = vperm.xlu0 %1326, %v1103
        %v1328 = vpop.permute.xlu0 %1327
        %1330 = vset.pattern.permute.xlu0 2
        %1331 = vperm.xlu0 %1330, %v1104
        %v1332 = vpop.permute.xlu0 %1331
        %1334 = vset.pattern.permute.xlu0 2
        %1335 = vperm.xlu0 %1334, %v1105
        %v1336 = vpop.permute.xlu0 %1335
        %1338 = vset.pattern.permute.xlu0 2
        %1339 = vperm.xlu0 %1338, %v1106
        %v1340 = vpop.permute.xlu0 %1339
        %1342 = vset.pattern.permute.xlu0 2
        %1343 = vperm.xlu0 %1342, %v1107
        %v1344 = vpop.permute.xlu0 %1343
        %1346 = vset.pattern.permute.xlu0 2
        %1347 = vperm.xlu0 %1346, %v1108
        %v1348 = vpop.permute.xlu0 %1347
        %1350 = vset.pattern.permute.xlu0 2
        %1351 = vperm.xlu0 %1350, %v1109
        %v1352 = vpop.permute.xlu0 %1351
        %1354 = vset.pattern.permute.xlu0 2
        %1355 = vperm.xlu0 %1354, %v1110
        %v1356 = vpop.permute.xlu0 %1355
        %1358 = vset.pattern.permute.xlu0 2
        %1359 = vperm.xlu0 %1358, %v1111
        %v1360 = vpop.permute.xlu0 %1359
        %1362 = vset.pattern.permute.xlu0 2
        %1363 = vperm.xlu0 %1362, %v1112
        %v1364 = vpop.permute.xlu0 %1363
        %1366 = vset.pattern.permute.xlu0 2
        %1367 = vperm.xlu0 %1366, %v1113
        %v1368 = vpop.permute.xlu0 %1367
        %1370 = vset.pattern.permute.xlu0 2
        %1371 = vperm.xlu0 %1370, %v1114
        %v1372 = vpop.permute.xlu0 %1371
        %v1374 = vperm.slane %v1115, 2
        %v1375 = vmul.f32 %v1312, %v1374
        %v1376 = vmul.f32 %v1316, %v1374
        %v1377 = vmul.f32 %v1320, %v1374
        %v1378 = vmul.f32 %v1324, %v1374
        %v1379 = vmul.f32 %v1328, %v1374
        %v1380 = vmul.f32 %v1332, %v1374
        %v1381 = vmul.f32 %v1336, %v1374
        %v1382 = vmul.f32 %v1340, %v1374
        %v1383 = vmul.f32 %v1344, %v1374
        %v1384 = vmul.f32 %v1348, %v1374
        %v1385 = vmul.f32 %v1352, %v1374
        %v1386 = vmul.f32 %v1356, %v1374
        %v1387 = vmul.f32 %v1360, %v1374
        %v1388 = vmul.f32 %v1364, %v1374
        %v1389 = vmul.f32 %v1368, %v1374
        %v1390 = vmul.f32 %v1372, %v1374
        %v1391 = vadd.f32 %v1294, %v1375
        %v1392 = vadd.f32 %v1295, %v1376
        %v1393 = vadd.f32 %v1296, %v1377
        %v1394 = vadd.f32 %v1297, %v1378
        %v1395 = vadd.f32 %v1298, %v1379
        %v1396 = vadd.f32 %v1299, %v1380
        %v1397 = vadd.f32 %v1300, %v1381
        %v1398 = vadd.f32 %v1301, %v1382
        %v1399 = vadd.f32 %v1302, %v1383
        %v1400 = vadd.f32 %v1303, %v1384
        %v1401 = vadd.f32 %v1304, %v1385
        %v1402 = vadd.f32 %v1305, %v1386
        %v1403 = vadd.f32 %v1306, %v1387
        %v1404 = vadd.f32 %v1307, %v1388
        %v1405 = vadd.f32 %v1308, %v1389
        %v1406 = vadd.f32 %v1309, %v1390
        %v1407 = vld [vmem:[%s8] sm:$0x1]
        %v1409 = vperm.slane %v1407, 0
        %v1411 = vadd.f32 %v1391, %v1409
        %v1412 = vadd.f32 %v1392, %v1409
        %v1413 = vadd.f32 %v1393, %v1409
        %v1414 = vadd.f32 %v1394, %v1409
        %v1415 = vadd.f32 %v1395, %v1409
        %v1416 = vadd.f32 %v1396, %v1409
        %v1417 = vadd.f32 %v1397, %v1409
        %v1418 = vadd.f32 %v1398, %v1409
        %v1419 = vadd.f32 %v1399, %v1409
        %v1420 = vadd.f32 %v1400, %v1409
        %v1421 = vadd.f32 %v1401, %v1409
        %v1422 = vadd.f32 %v1402, %v1409
        %v1423 = vadd.f32 %v1403, %v1409
        %v1424 = vadd.f32 %v1404, %v1409
        %v1425 = vadd.f32 %v1405, %v1409
        %v1426 = vadd.f32 %v1406, %v1409
        %1427 = vst [vmem:[%s308] sm:$0xff] %v1411
        %1428 = vst [vmem:[%s308 + $0x8] sm:$0xff] %v1412
        %1429 = vst [vmem:[%s308 + $0x10] sm:$0xff] %v1413
        %1430 = vst [vmem:[%s308 + $0x18] sm:$0xff] %v1414
        %1431 = vst [vmem:[%s308 + $0x20] sm:$0xff] %v1415
        %1432 = vst [vmem:[%s308 + $0x28] sm:$0xff] %v1416
        %1433 = vst [vmem:[%s308 + $0x30] sm:$0xff] %v1417
        %1434 = vst [vmem:[%s308 + $0x38] sm:$0xff] %v1418
        %1435 = vst [vmem:[%s308 + $0x40] sm:$0xff] %v1419
        %1436 = vst [vmem:[%s308 + $0x48] sm:$0xff] %v1420
        %1437 = vst [vmem:[%s308 + $0x50] sm:$0xff] %v1421
        %1438 = vst [vmem:[%s308 + $0x58] sm:$0xff] %v1422
        %1439 = vst [vmem:[%s308 + $0x60] sm:$0xff] %v1423
        %1440 = vst [vmem:[%s308 + $0x68] sm:$0xff] %v1424
        %1441 = vst [vmem:[%s308 + $0x70] sm:$0xff] %v1425
        %1442 = vst [vmem:[%s308 + $0x78] sm:$0xff] %v1426
        %s1443 = sand.u32 %s212, 1
        %s1444 = scalar_lea.sflag [#allocation6], %s1443
        %s1445 = sand.u32 %s212, 1
        %s1446 = smul.addr %s1445, 128
        %s1447 = scalar_lea.vmem [#allocation5], %s1446
        // Predicated region
        $region60: #{tpu_custom_call.1} parent=51 // pred_check
          %p1448 = pneg %p222
        $region61: #{tpu_custom_call.1} parent=51 // pred_check_branch
          %1450 = sbr.rel (%p1448) target = $region63
        $region62: #{tpu_custom_call.1} parent=51 // pred_region
          %s1451 = smul.u32 16, %s31
          %1453 = vsyncadd %s1444, 0
          %s1454 = smul.addr %s1451, 8
          %s1455 = scalar_lea.hbm %s9, %s1454
          %s1456 = sshll.u32 %s1447, 4
          %s1457 = int_to_ptr.vmem [resolvable:$true] %s1456
          %s1458 = sshll.u32 %s1455, 4
          %s1459 = int_to_ptr.hbm [resolvable:$true] %s1458
          %1464 = dma.vmem_to_hbm [thread:$0]  %s1457, 2048, %s1459, %s1444, 128, 128, 8
        $region63: #{tpu_custom_call.1} parent=51 // pred_fallthru
          _
      $region52: #{tpu_custom_call.1} parent=5 // pred_fallthru
        _
      %p1465 = scmp.le.s32.totalorder 2, %s26
      // Predicated region
      $region64: #{tpu_custom_call.1} parent=5 // pred_check
        %p1466 = pneg %p1465
      $region65: #{tpu_custom_call.1} parent=5 // pred_check_branch
        %1468 = sbr.rel (%p1466) target = $region67
      $region66: #{tpu_custom_call.1} parent=5 // pred_region
        %s1469 = ssub.s32 %s26, 2
        // Predicated region
        $region68: #{tpu_custom_call.1} parent=66 // pred_check
          %p1470 = pneg %p228
        $region69: #{tpu_custom_call.1} parent=66 // pred_check_branch
          %1472 = sbr.rel (%p1470) target = $region71
        $region70: #{tpu_custom_call.1} parent=66 // pred_region
          %s1473 = sand.u32 %s213, 1
          %s1474 = scalar_lea.sflag [#allocation6], %s1473
          %s1475 = sand.u32 %s213, 1
          %s1476 = smul.addr %s1475, 128
          %s1477 = scalar_lea.vmem [#allocation5], %s1476
          %1479 = dma.done %s1474, 2048
        $region71: #{tpu_custom_call.1} parent=66 // pred_fallthru
          _
      $region67: #{tpu_custom_call.1} parent=5 // pred_fallthru
        _
    $region6: #{tpu_custom_call.1} parent=1 // loop_footer
      %s30 = sadd.s32 1, %s26
    $region7: #{tpu_custom_call.1} parent=1 // loop_footer_branch
      %25 = sbr.rel target = $region3
    $region8: #{tpu_custom_call.1} parent=1 // loop_exit
      _
    %1480 = vsyncpa [#allocation6], 1
    %s1481 = scalar_lea.sflag [#allocation6], 1
    %1482 = vsyncpa %s1481, 1

</llo_original>
